<compile_context>
chip_gen: v6e
topology: v6e:2x2x1
jax: 0.10.0
libtpu: 0.0.40
codegen_flags: <defaults>
</compile_context>

<pallas_src>
import functools

import jax
import jax.numpy as jnp
from jax.experimental import pallas as pl
from jax.experimental.pallas import tpu as pltpu

BN_EPS = 1e-5

CHEM_DIM = 300   # contextpred emb_dim
PROT_DIM = 256   # DISAE prot_embed_dim (resnet output, flattened)
CAT_DIM = CHEM_DIM + PROT_DIM   # 556
HID_DIM = 128
OUT_DIM = 64


def _round_up(x, m):
    return (x + m - 1) // m * m


def _dti_kernel(chem_ref, prot_ref, ap_ref, apt_ref,
                w1c_ref, w1p_ref, b1_ref, w2_ref, b2_ref, o_ref):
    chem = chem_ref[...]                                   # [TB, 300]
    prot = prot_ref[...]                                   # [TB, 256]

    # ---- AttentivePooling (length-1 sequences -> plain matmuls on MXU) ----
    wm1 = jnp.tanh(jnp.dot(prot, apt_ref[...],
                           preferred_element_type=jnp.float32))   # [TB, 300]
    wm2 = jnp.tanh(jnp.dot(chem, ap_ref[...],
                           preferred_element_type=jnp.float32))   # [TB, 256]

    # softmax over the last (lane) dim
    e1 = jnp.exp(wm1 - jnp.max(wm1, axis=-1, keepdims=True))
    s1 = e1 / jnp.sum(e1, axis=-1, keepdims=True)
    e2 = jnp.exp(wm2 - jnp.max(wm2, axis=-1, keepdims=True))
    s2 = e2 / jnp.sum(e2, axis=-1, keepdims=True)

    chem_v = chem * s1                                     # [TB, 300]
    prot_v = prot * s2                                     # [TB, 256]

    # ---- interaction_pooler (Dropout = identity at eval, BN folded) ----
    h = (jnp.dot(chem_v, w1c_ref[...], preferred_element_type=jnp.float32)
         + jnp.dot(prot_v, w1p_ref[...], preferred_element_type=jnp.float32)
         + b1_ref[...])                                    # [TB, 128]
    h = jnp.maximum(h, 0.0)
    y = jnp.dot(h, w2_ref[...], preferred_element_type=jnp.float32) + b2_ref[...]
    o_ref[...] = y.astype(o_ref.dtype)                     # [TB, 64]


def dti_forward(chem, prot, params, *, tb=None):
    """Attentive pooling + interaction_pooler (eval mode) via one Pallas kernel."""
    B = chem.shape[0]

    # ---- Fold BatchNorm1d (eval) into the Linear weights/biases (exact) ----
    sc1 = params["g1"] * jax.lax.rsqrt(params["v1"] + BN_EPS)          # [1,128]
    w1f = params["w1"] * sc1                                           # [556,128]
    b1f = (params["b1"] - params["m1"]) * sc1 + params["be1"]          # [1,128]
    sc2 = params["g2"] * jax.lax.rsqrt(params["v2"] + BN_EPS)          # [1,64]
    w2f = params["w2"] * sc2                                           # [128,64]
    b2f = (params["b2"] - params["m2"]) * sc2 + params["be2"]          # [1,64]

    # Split the first layer so no in-kernel concat is needed.
    w1c = w1f[:CHEM_DIM]                                               # [300,128]
    w1p = w1f[CHEM_DIM:]                                               # [256,128]

    ap = params["ap_param"]                                            # [300,256]
    apt = ap.T                                                         # [256,300]

    # ---- Batch tiling (pipelined, megacore-parallel) ----
    if tb is None:
        tb = min(512, _round_up(B, 8))
    Bp = _round_up(B, tb)
    if Bp != B:
        pad = Bp - B
        chem = jnp.pad(chem, ((0, pad), (0, 0)))
        prot = jnp.pad(prot, ((0, pad), (0, 0)))

    grid = (Bp // tb,)

    flops = 2 * Bp * (PROT_DIM * CHEM_DIM + CHEM_DIM * PROT_DIM
                      + CHEM_DIM * HID_DIM + PROT_DIM * HID_DIM + HID_DIM * OUT_DIM)
    transcendentals = Bp * (CHEM_DIM + PROT_DIM) * 2  # tanh + exp
    bytes_accessed = 4 * (Bp * (CHEM_DIM + PROT_DIM + OUT_DIM)
                          + 2 * CHEM_DIM * PROT_DIM
                          + CAT_DIM * HID_DIM + HID_DIM * OUT_DIM
                          + HID_DIM + OUT_DIM)

    out = pl.pallas_call(
        _dti_kernel,
        out_shape=jax.ShapeDtypeStruct((Bp, OUT_DIM), jnp.float32),
        grid=grid,
        in_specs=[
            pl.BlockSpec((tb, CHEM_DIM), lambda i: (i, 0)),        # chem (tiled)
            pl.BlockSpec((tb, PROT_DIM), lambda i: (i, 0)),        # prot (tiled)
            pl.BlockSpec((CHEM_DIM, PROT_DIM), lambda i: (0, 0)),  # attn param
            pl.BlockSpec((PROT_DIM, CHEM_DIM), lambda i: (0, 0)),  # attn param^T
            pl.BlockSpec((CHEM_DIM, HID_DIM), lambda i: (0, 0)),   # W1 (chem half)
            pl.BlockSpec((PROT_DIM, HID_DIM), lambda i: (0, 0)),   # W1 (prot half)
            pl.BlockSpec((1, HID_DIM), lambda i: (0, 0)),          # b1 (BN folded)
            pl.BlockSpec((HID_DIM, OUT_DIM), lambda i: (0, 0)),    # W2 (BN folded)
            pl.BlockSpec((1, OUT_DIM), lambda i: (0, 0)),          # b2 (BN folded)
        ],
        out_specs=pl.BlockSpec((tb, OUT_DIM), lambda i: (i, 0)),
        compiler_params=pltpu.CompilerParams(
            dimension_semantics=("parallel",)),
        cost_estimate=pl.CostEstimate(
            flops=flops, transcendentals=transcendentals,
            bytes_accessed=bytes_accessed),
    )(chem, prot, ap, apt, w1c, w1p, b1f, w2f, b2f)

    return out[:B]


def make_params(key):
    """Deterministic synthetic parameters (pretrained weights are unavailable)."""
    ks = jax.random.split(key, 12)

    def lin_init(kw, kb, fan_in, fan_out):
        bound = 1.0 / jnp.sqrt(fan_in)
        w = jax.random.uniform(kw, (fan_in, fan_out), jnp.float32, -bound, bound)
        b = jax.random.uniform(kb, (1, fan_out), jnp.float32, -bound, bound)
        return w, b

    # AttentivePooling param is zero-init in the module; use non-zero synthetic
    # values here so the attention math is actually exercised.
    ap_param = jax.random.uniform(ks[0], (CHEM_DIM, PROT_DIM), jnp.float32, -0.08, 0.08)

    w1, b1 = lin_init(ks[1], ks[2], CAT_DIM, HID_DIM)
    w2, b2 = lin_init(ks[3], ks[4], HID_DIM, OUT_DIM)

    def bn_init(kg, kb, km, kv, n):
        g = 1.0 + 0.1 * jax.random.normal(kg, (1, n), jnp.float32)
        be = 0.05 * jax.random.normal(kb, (1, n), jnp.float32)
        m = 0.1 * jax.random.normal(km, (1, n), jnp.float32)
        v = 1.0 + 0.05 * jnp.abs(jax.random.normal(kv, (1, n), jnp.float32))
        return g, be, m, v

    g1, be1, m1, v1 = bn_init(ks[5], ks[6], ks[7], ks[7], HID_DIM)
    g2, be2, m2, v2 = bn_init(ks[8], ks[9], ks[10], ks[11], OUT_DIM)

    return {
        "ap_param": ap_param,
        "w1": w1, "b1": b1, "g1": g1, "be1": be1, "m1": m1, "v1": v1,
        "w2": w2, "b2": b2, "g2": g2, "be2": be2, "m2": m2, "v2": v2,
    }


def reference_forward(chem, prot, p):
    """Pure-JAX reference with un-folded BatchNorm (matches PyTorch eval math)."""
    A = p["ap_param"]
    hi = jax.lax.Precision.HIGHEST
    wm1 = jnp.tanh(jnp.matmul(prot, A.T, precision=hi))     # [B, 300]
    wm2 = jnp.tanh(jnp.matmul(chem, A, precision=hi))       # [B, 256]
    s1 = jax.nn.softmax(wm1, axis=-1)
    s2 = jax.nn.softmax(wm2, axis=-1)
    chem_v = chem * s1
    prot_v = prot * s2
    x = jnp.concatenate([chem_v, prot_v], axis=1)            # [B, 556]
    h = jnp.matmul(x, p["w1"], precision=hi) + p["b1"]
    h = (h - p["m1"]) * jax.lax.rsqrt(p["v1"] + BN_EPS) * p["g1"] + p["be1"]
    h = jnp.maximum(h, 0.0)
    y = jnp.matmul(h, p["w2"], precision=hi) + p["b2"]
    y = (y - p["m2"]) * jax.lax.rsqrt(p["v2"] + BN_EPS) * p["g2"] + p["be2"]
    return y


if __name__ == "__main__":
    key = jax.random.PRNGKey(0)
    k_chem, k_prot, k_params = jax.random.split(key, 3)

    # TODO(synk): proteinEmbedding (DISAE), ResnetEncoderModel, the ligand GNN and
    # to_dense_batch are external pretrained models with no available definition;
    # their pooled per-example representations are synthesized here.
    B = 8
    chem = jax.random.normal(k_chem, (B, CHEM_DIM), jnp.float32)
    prot = jax.random.normal(k_prot, (B, PROT_DIM), jnp.float32)

    params = make_params(k_params)

    out = dti_forward(chem, prot, params)
    out = jax.block_until_ready(out)

    ref = reference_forward(chem, prot, params)
    assert out.shape == (B, OUT_DIM)
    assert jnp.allclose(out, ref, atol=1e-3, rtol=1e-3)

    print("KERNEL_OK")
</pallas_src>

<mosaic_0001>
module attributes {stable_mosaic.version = 11 : i64} {
  func.func @_dti_kernel(%arg0: i32, %arg1: memref<8x300xf32, #tpu.memory_space<vmem>>, %arg2: memref<8x256xf32, #tpu.memory_space<vmem>>, %arg3: memref<300x256xf32, #tpu.memory_space<vmem>>, %arg4: memref<256x300xf32, #tpu.memory_space<vmem>>, %arg5: memref<300x128xf32, #tpu.memory_space<vmem>>, %arg6: memref<256x128xf32, #tpu.memory_space<vmem>>, %arg7: memref<1x128xf32, #tpu.memory_space<vmem>>, %arg8: memref<128x64xf32, #tpu.memory_space<vmem>>, %arg9: memref<1x64xf32, #tpu.memory_space<vmem>>, %arg10: memref<8x64xf32, #tpu.memory_space<vmem>>) attributes {dimension_semantics = [#tpu.dimension_semantics<parallel>], iteration_bounds = array<i64: 1>, scalar_prefetch = 0 : i64, scratch_operands = 0 : i64, tpu.core_type = #tpu.core_type<tc>, window_params = [{transform_indices = @transform_0, window_bounds = array<i64: 8, 300>}, {transform_indices = @transform_1, window_bounds = array<i64: 8, 256>}, {pipeline_mode = #tpu.pipeline_mode<synchronous>, transform_indices = @transform_2, window_bounds = array<i64: 300, 256>}, {pipeline_mode = #tpu.pipeline_mode<synchronous>, transform_indices = @transform_3, window_bounds = array<i64: 256, 300>}, {pipeline_mode = #tpu.pipeline_mode<synchronous>, transform_indices = @transform_4, window_bounds = array<i64: 300, 128>}, {pipeline_mode = #tpu.pipeline_mode<synchronous>, transform_indices = @transform_5, window_bounds = array<i64: 256, 128>}, {pipeline_mode = #tpu.pipeline_mode<synchronous>, transform_indices = @transform_6, window_bounds = array<i64: 1, 128>}, {pipeline_mode = #tpu.pipeline_mode<synchronous>, transform_indices = @transform_7, window_bounds = array<i64: 128, 64>}, {pipeline_mode = #tpu.pipeline_mode<synchronous>, transform_indices = @transform_8, window_bounds = array<i64: 1, 64>}, {transform_indices = @transform_9, window_bounds = array<i64: 8, 64>}]} {
    %c0 = arith.constant 0 : index
    %c0_0 = arith.constant 0 : index
    %0 = vector.load %arg1[%c0, %c0_0] : memref<8x300xf32, #tpu.memory_space<vmem>>, vector<8x300xf32>
    %c0_1 = arith.constant 0 : index
    %c0_2 = arith.constant 0 : index
    %1 = vector.load %arg2[%c0_1, %c0_2] : memref<8x256xf32, #tpu.memory_space<vmem>>, vector<8x256xf32>
    %c0_3 = arith.constant 0 : index
    %c0_4 = arith.constant 0 : index
    %2 = vector.load %arg4[%c0_3, %c0_4] : memref<256x300xf32, #tpu.memory_space<vmem>>, vector<256x300xf32>
    %cst = arith.constant dense<0.000000e+00> : vector<8x300xf32>
    %3 = tpu.matmul %1, %2, %cst {dimension_numbers = #tpu.dot_dimension_numbers<[1], [0], [0], [1], [0, 0, 1, 1], [], []>} : vector<8x256xf32>, vector<256x300xf32>, vector<8x300xf32> -> vector<8x300xf32>
    %4 = math.tanh %3 : vector<8x300xf32>
    %c0_5 = arith.constant 0 : index
    %c0_6 = arith.constant 0 : index
    %5 = vector.load %arg3[%c0_5, %c0_6] : memref<300x256xf32, #tpu.memory_space<vmem>>, vector<300x256xf32>
    %cst_7 = arith.constant dense<0.000000e+00> : vector<8x256xf32>
    %6 = tpu.matmul %0, %5, %cst_7 {dimension_numbers = #tpu.dot_dimension_numbers<[1], [0], [0], [1], [0, 0, 1, 1], [], []>} : vector<8x300xf32>, vector<300x256xf32>, vector<8x256xf32> -> vector<8x256xf32>
    %7 = math.tanh %6 : vector<8x256xf32>
    %cst_8 = arith.constant dense<0xFF800000> : vector<8xf32>
    %8 = vector.multi_reduction <maximumf>, %4, %cst_8 [1] : vector<8x300xf32> to vector<8xf32>
    %9 = vector.shape_cast %8 : vector<8xf32> to vector<8x1xf32>
    %10 = vector.broadcast %9 : vector<8x1xf32> to vector<8x300xf32>
    %11 = arith.subf %4, %10 : vector<8x300xf32>
    %12 = math.exp %11 : vector<8x300xf32>
    %cst_9 = arith.constant dense<0.000000e+00> : vector<8xf32>
    %13 = vector.multi_reduction <add>, %12, %cst_9 [1] : vector<8x300xf32> to vector<8xf32>
    %14 = vector.shape_cast %13 : vector<8xf32> to vector<8x1xf32>
    %15 = vector.broadcast %14 : vector<8x1xf32> to vector<8x300xf32>
    %16 = arith.divf %12, %15 : vector<8x300xf32>
    %cst_10 = arith.constant dense<0xFF800000> : vector<8xf32>
    %17 = vector.multi_reduction <maximumf>, %7, %cst_10 [1] : vector<8x256xf32> to vector<8xf32>
    %18 = vector.shape_cast %17 : vector<8xf32> to vector<8x1xf32>
    %19 = vector.broadcast %18 : vector<8x1xf32> to vector<8x256xf32>
    %20 = arith.subf %7, %19 : vector<8x256xf32>
    %21 = math.exp %20 : vector<8x256xf32>
    %cst_11 = arith.constant dense<0.000000e+00> : vector<8xf32>
    %22 = vector.multi_reduction <add>, %21, %cst_11 [1] : vector<8x256xf32> to vector<8xf32>
    %23 = vector.shape_cast %22 : vector<8xf32> to vector<8x1xf32>
    %24 = vector.broadcast %23 : vector<8x1xf32> to vector<8x256xf32>
    %25 = arith.divf %21, %24 : vector<8x256xf32>
    %26 = arith.mulf %0, %16 : vector<8x300xf32>
    %27 = arith.mulf %1, %25 : vector<8x256xf32>
    %c0_12 = arith.constant 0 : index
    %c0_13 = arith.constant 0 : index
    %28 = vector.load %arg5[%c0_12, %c0_13] : memref<300x128xf32, #tpu.memory_space<vmem>>, vector<300x128xf32>
    %cst_14 = arith.constant dense<0.000000e+00> : vector<8x128xf32>
    %29 = tpu.matmul %26, %28, %cst_14 {dimension_numbers = #tpu.dot_dimension_numbers<[1], [0], [0], [1], [0, 0, 1, 1], [], []>} : vector<8x300xf32>, vector<300x128xf32>, vector<8x128xf32> -> vector<8x128xf32>
    %c0_15 = arith.constant 0 : index
    %c0_16 = arith.constant 0 : index
    %30 = vector.load %arg6[%c0_15, %c0_16] : memref<256x128xf32, #tpu.memory_space<vmem>>, vector<256x128xf32>
    %cst_17 = arith.constant dense<0.000000e+00> : vector<8x128xf32>
    %31 = tpu.matmul %27, %30, %cst_17 {dimension_numbers = #tpu.dot_dimension_numbers<[1], [0], [0], [1], [0, 0, 1, 1], [], []>} : vector<8x256xf32>, vector<256x128xf32>, vector<8x128xf32> -> vector<8x128xf32>
    %32 = arith.addf %29, %31 : vector<8x128xf32>
    %c0_18 = arith.constant 0 : index
    %c0_19 = arith.constant 0 : index
    %33 = vector.load %arg7[%c0_18, %c0_19] : memref<1x128xf32, #tpu.memory_space<vmem>>, vector<1x128xf32>
    %34 = vector.broadcast %33 : vector<1x128xf32> to vector<8x128xf32>
    %35 = arith.addf %32, %34 : vector<8x128xf32>
    %cst_20 = arith.constant 0.000000e+00 : f32
    %36 = vector.broadcast %cst_20 : f32 to vector<8x128xf32>
    %37 = arith.maximumf %35, %36 : vector<8x128xf32>
    %c0_21 = arith.constant 0 : index
    %c0_22 = arith.constant 0 : index
    %38 = vector.load %arg8[%c0_21, %c0_22] : memref<128x64xf32, #tpu.memory_space<vmem>>, vector<128x64xf32>
    %cst_23 = arith.constant dense<0.000000e+00> : vector<8x64xf32>
    %39 = tpu.matmul %37, %38, %cst_23 {dimension_numbers = #tpu.dot_dimension_numbers<[1], [0], [0], [1], [0, 0, 1, 1], [], []>} : vector<8x128xf32>, vector<128x64xf32>, vector<8x64xf32> -> vector<8x64xf32>
    %c0_24 = arith.constant 0 : index
    %c0_25 = arith.constant 0 : index
    %40 = vector.load %arg9[%c0_24, %c0_25] : memref<1x64xf32, #tpu.memory_space<vmem>>, vector<1x64xf32>
    %41 = vector.broadcast %40 : vector<1x64xf32> to vector<8x64xf32>
    %42 = arith.addf %39, %41 : vector<8x64xf32>
    %c0_26 = arith.constant 0 : index
    %c0_27 = arith.constant 0 : index
    %43 = vector.load %arg10[%c0_26, %c0_27] : memref<8x64xf32, #tpu.memory_space<vmem>>, vector<8x64xf32>
    tpu.vector_store %arg10[%c0_26, %c0_27], %42 {strides = array<i32>} : memref<8x64xf32, #tpu.memory_space<vmem>>, vector<8x64xf32>,
    return
  }
  func.func @transform_0(%arg0: i32) -> (i32, i32) {
    %c0_i32 = arith.constant 0 : i32
    %c0_i32_0 = arith.constant 0 : i32
    return %arg0, %c0_i32 : i32, i32
  }
  func.func @transform_1(%arg0: i32) -> (i32, i32) {
    %c0_i32 = arith.constant 0 : i32
    %c0_i32_0 = arith.constant 0 : i32
    return %arg0, %c0_i32 : i32, i32
  }
  func.func @transform_2(%arg0: i32) -> (i32, i32) {
    %c0_i32 = arith.constant 0 : i32
    %c0_i32_0 = arith.constant 0 : i32
    %c0_i32_1 = arith.constant 0 : i32
    return %c0_i32, %c0_i32_0 : i32, i32
  }
  func.func @transform_3(%arg0: i32) -> (i32, i32) {
    %c0_i32 = arith.constant 0 : i32
    %c0_i32_0 = arith.constant 0 : i32
    %c0_i32_1 = arith.constant 0 : i32
    return %c0_i32, %c0_i32_0 : i32, i32
  }
  func.func @transform_4(%arg0: i32) -> (i32, i32) {
    %c0_i32 = arith.constant 0 : i32
    %c0_i32_0 = arith.constant 0 : i32
    %c0_i32_1 = arith.constant 0 : i32
    return %c0_i32, %c0_i32_0 : i32, i32
  }
  func.func @transform_5(%arg0: i32) -> (i32, i32) {
    %c0_i32 = arith.constant 0 : i32
    %c0_i32_0 = arith.constant 0 : i32
    %c0_i32_1 = arith.constant 0 : i32
    return %c0_i32, %c0_i32_0 : i32, i32
  }
  func.func @transform_6(%arg0: i32) -> (i32, i32) {
    %c0_i32 = arith.constant 0 : i32
    %c0_i32_0 = arith.constant 0 : i32
    %c0_i32_1 = arith.constant 0 : i32
    return %c0_i32, %c0_i32_0 : i32, i32
  }
  func.func @transform_7(%arg0: i32) -> (i32, i32) {
    %c0_i32 = arith.constant 0 : i32
    %c0_i32_0 = arith.constant 0 : i32
    %c0_i32_1 = arith.constant 0 : i32
    return %c0_i32, %c0_i32_0 : i32, i32
  }
  func.func @transform_8(%arg0: i32) -> (i32, i32) {
    %c0_i32 = arith.constant 0 : i32
    %c0_i32_0 = arith.constant 0 : i32
    %c0_i32_1 = arith.constant 0 : i32
    return %c0_i32, %c0_i32_0 : i32, i32
  }
  func.func @transform_9(%arg0: i32) -> (i32, i32) {
    %c0_i32 = arith.constant 0 : i32
    %c0_i32_0 = arith.constant 0 : i32
    return %arg0, %c0_i32 : i32, i32
  }
}

</mosaic_0001>

<llo_original>
// kernel: tpu_custom_call.1
$region0: #{tpu_custom_call.1}
  #allocation0 [shape = 'u32[]', space=smem, size = 0x4, offset = 0x4, fixed_abs, tag = 'smem constant byte address 0x4 - core index']
  #allocation1 [shape = 'u32[144,128]{1,0:T(1,128)}', space=vmem, size = 0x12000, scoped, tag = 'internal scratch']
  %s0 = inlined_call_operand.vmem [shape: f32[8,300], index: 0, kind: input, shape index: {}]
  %s1 = inlined_call_operand.vmem [shape: f32[8,256], index: 1, kind: input, shape index: {}]
  %s2 = inlined_call_operand.vmem [shape: f32[300,256], index: 2, kind: input, shape index: {}]
  %s3 = inlined_call_operand.vmem [shape: f32[256,300], index: 3, kind: input, shape index: {}]
  %s4 = inlined_call_operand.vmem [shape: f32[300,128], index: 4, kind: input, shape index: {}]
  %s5 = inlined_call_operand.vmem [shape: f32[256,128], index: 5, kind: input, shape index: {}]
  %s6 = inlined_call_operand.vmem [shape: f32[1,128], index: 6, kind: input, shape index: {}]
  %s7 = inlined_call_operand.vmem [shape: f32[128,64], index: 7, kind: input, shape index: {}]
  %s8 = inlined_call_operand.vmem [shape: f32[1,64], index: 8, kind: input, shape index: {}]
  %s9 = inlined_call_operand.hbm [shape: f32[8,64], index: 9, kind: output, shape index: {}]
  %s10 = sld [smem:[#allocation0]]
  $region46: #{tpu_custom_call.1} parent=0
    _
  %s12 = ssub.s32 1, %s10
  %s13 = scalar_select 0, %s12, %s10
  $region1: #{tpu_custom_call.1} parent=0
    #allocation2 [shape = 'u8[4096]{0}', space=vmem, size = 0x1000, scoped, tag = 'output window, operand 0, single buffered']
    #allocation3 [shape = 's32[1]{0}', space=sflag, size = 0x4, scoped, tag = 'scoped memory for tpu_custom_call.1']
    %14 = vsyncpa [#allocation3], 0
    // Predicated region
    $region2: #{tpu_custom_call.1} parent=1 // pred_check
      _
    $region3: #{tpu_custom_call.1} parent=1 // pred_check_branch
      %16 = sbr.rel (0) target = $region5
    $region4: #{tpu_custom_call.1} parent=1 // pred_region
      _
    $region5: #{tpu_custom_call.1} parent=1 // pred_fallthru
      _
    // Predicated region
    $region6: #{tpu_custom_call.1} parent=1 // pred_check
      _
    $region7: #{tpu_custom_call.1} parent=1 // pred_check_branch
      %18 = sbr.rel (0) target = $region9
    $region8: #{tpu_custom_call.1} parent=1 // pred_region
      _
    $region9: #{tpu_custom_call.1} parent=1 // pred_fallthru
      _
    // Predicated region
    $region10: #{tpu_custom_call.1} parent=1 // pred_check
      _
    $region11: #{tpu_custom_call.1} parent=1 // pred_check_branch
      %20 = sbr.rel (0) target = $region13
    $region12: #{tpu_custom_call.1} parent=1 // pred_region
      _
    $region13: #{tpu_custom_call.1} parent=1 // pred_fallthru
      _
    // Predicated region
    $region14: #{tpu_custom_call.1} parent=1 // pred_check
      _
    $region15: #{tpu_custom_call.1} parent=1 // pred_check_branch
      %22 = sbr.rel (0) target = $region17
    $region16: #{tpu_custom_call.1} parent=1 // pred_region
      _
    $region17: #{tpu_custom_call.1} parent=1 // pred_fallthru
      _
    // Predicated region
    $region18: #{tpu_custom_call.1} parent=1 // pred_check
      _
    $region19: #{tpu_custom_call.1} parent=1 // pred_check_branch
      %24 = sbr.rel (0) target = $region21
    $region20: #{tpu_custom_call.1} parent=1 // pred_region
      _
    $region21: #{tpu_custom_call.1} parent=1 // pred_fallthru
      _
    // Predicated region
    $region22: #{tpu_custom_call.1} parent=1 // pred_check
      _
    $region23: #{tpu_custom_call.1} parent=1 // pred_check_branch
      %26 = sbr.rel (0) target = $region25
    $region24: #{tpu_custom_call.1} parent=1 // pred_region
      _
    $region25: #{tpu_custom_call.1} parent=1 // pred_fallthru
      _
    // Predicated region
    $region26: #{tpu_custom_call.1} parent=1 // pred_check
      _
    $region27: #{tpu_custom_call.1} parent=1 // pred_check_branch
      %28 = sbr.rel (0) target = $region29
    $region28: #{tpu_custom_call.1} parent=1 // pred_region
      _
    $region29: #{tpu_custom_call.1} parent=1 // pred_fallthru
      _
    // Predicated region
    $region30: #{tpu_custom_call.1} parent=1 // pred_check
      _
    $region31: #{tpu_custom_call.1} parent=1 // pred_check_branch
      %30 = sbr.rel (0) target = $region33
    $region32: #{tpu_custom_call.1} parent=1 // pred_region
      _
    $region33: #{tpu_custom_call.1} parent=1 // pred_fallthru
      _
    // Predicated region
    $region34: #{tpu_custom_call.1} parent=1 // pred_check
      _
    $region35: #{tpu_custom_call.1} parent=1 // pred_check_branch
      %32 = sbr.rel (0) target = $region37
    $region36: #{tpu_custom_call.1} parent=1 // pred_region
      _
    $region37: #{tpu_custom_call.1} parent=1 // pred_fallthru
      _
    %v33 = vld [vmem:[%s0] sm:$0xff]
    %v34 = vld [vmem:[%s0 + $0x8] sm:$0xff]
    %v35 = vld [vmem:[%s0 + $0x10] sm:$0xff]
    %v36 = vld [vmem:[%s1] sm:$0xff]
    %v37 = vld [vmem:[%s1 + $0x8] sm:$0xff]
    %v38 = vld [vmem:[%s3] sm:$0xff]
    %v39 = vld [vmem:[%s3 + $0x8] sm:$0xff]
    %v40 = vld [vmem:[%s3 + $0x10] sm:$0xff]
    %v41 = vld [vmem:[%s3 + $0x18] sm:$0xff]
    %v42 = vld [vmem:[%s3 + $0x20] sm:$0xff]
    %v43 = vld [vmem:[%s3 + $0x28] sm:$0xff]
    %v44 = vld [vmem:[%s3 + $0x30] sm:$0xff]
    %v45 = vld [vmem:[%s3 + $0x38] sm:$0xff]
    %v46 = vld [vmem:[%s3 + $0x40] sm:$0xff]
    %v47 = vld [vmem:[%s3 + $0x48] sm:$0xff]
    %v48 = vld [vmem:[%s3 + $0x50] sm:$0xff]
    %v49 = vld [vmem:[%s3 + $0x58] sm:$0xff]
    %v50 = vld [vmem:[%s3 + $0x60] sm:$0xff]
    %v51 = vld [vmem:[%s3 + $0x68] sm:$0xff]
    %v52 = vld [vmem:[%s3 + $0x70] sm:$0xff]
    %v53 = vld [vmem:[%s3 + $0x78] sm:$0xff]
    %v54 = vld [vmem:[%s3 + $0x80] sm:$0xff]
    %v55 = vld [vmem:[%s3 + $0x88] sm:$0xff]
    %v56 = vld [vmem:[%s3 + $0x90] sm:$0xff]
    %v57 = vld [vmem:[%s3 + $0x98] sm:$0xff]
    %v58 = vld [vmem:[%s3 + $0xa0] sm:$0xff]
    %v59 = vld [vmem:[%s3 + $0xa8] sm:$0xff]
    %v60 = vld [vmem:[%s3 + $0xb0] sm:$0xff]
    %v61 = vld [vmem:[%s3 + $0xb8] sm:$0xff]
    %v62 = vld [vmem:[%s3 + $0xc0] sm:$0xff]
    %v63 = vld [vmem:[%s3 + $0xc8] sm:$0xff]
    %v64 = vld [vmem:[%s3 + $0xd0] sm:$0xff]
    %v65 = vld [vmem:[%s3 + $0xd8] sm:$0xff]
    %v66 = vld [vmem:[%s3 + $0xe0] sm:$0xff]
    %v67 = vld [vmem:[%s3 + $0xe8] sm:$0xff]
    %v68 = vld [vmem:[%s3 + $0xf0] sm:$0xff]
    %v69 = vld [vmem:[%s3 + $0xf8] sm:$0xff]
    %v70 = vld [vmem:[%s3 + $0x100] sm:$0xff]
    %v71 = vld [vmem:[%s3 + $0x108] sm:$0xff]
    %v72 = vld [vmem:[%s3 + $0x110] sm:$0xff]
    %v73 = vld [vmem:[%s3 + $0x118] sm:$0xff]
    %v74 = vld [vmem:[%s3 + $0x120] sm:$0xff]
    %v75 = vld [vmem:[%s3 + $0x128] sm:$0xff]
    %v76 = vld [vmem:[%s3 + $0x130] sm:$0xff]
    %v77 = vld [vmem:[%s3 + $0x138] sm:$0xff]
    %v78 = vld [vmem:[%s3 + $0x140] sm:$0xff]
    %v79 = vld [vmem:[%s3 + $0x148] sm:$0xff]
    %v80 = vld [vmem:[%s3 + $0x150] sm:$0xff]
    %v81 = vld [vmem:[%s3 + $0x158] sm:$0xff]
    %v82 = vld [vmem:[%s3 + $0x160] sm:$0xff]
    %v83 = vld [vmem:[%s3 + $0x168] sm:$0xff]
    %v84 = vld [vmem:[%s3 + $0x170] sm:$0xff]
    %v85 = vld [vmem:[%s3 + $0x178] sm:$0xff]
    %v86 = vld [vmem:[%s3 + $0x180] sm:$0xff]
    %v87 = vld [vmem:[%s3 + $0x188] sm:$0xff]
    %v88 = vld [vmem:[%s3 + $0x190] sm:$0xff]
    %v89 = vld [vmem:[%s3 + $0x198] sm:$0xff]
    %v90 = vld [vmem:[%s3 + $0x1a0] sm:$0xff]
    %v91 = vld [vmem:[%s3 + $0x1a8] sm:$0xff]
    %v92 = vld [vmem:[%s3 + $0x1b0] sm:$0xff]
    %v93 = vld [vmem:[%s3 + $0x1b8] sm:$0xff]
    %v94 = vld [vmem:[%s3 + $0x1c0] sm:$0xff]
    %v95 = vld [vmem:[%s3 + $0x1c8] sm:$0xff]
    %v96 = vld [vmem:[%s3 + $0x1d0] sm:$0xff]
    %v97 = vld [vmem:[%s3 + $0x1d8] sm:$0xff]
    %v98 = vld [vmem:[%s3 + $0x1e0] sm:$0xff]
    %v99 = vld [vmem:[%s3 + $0x1e8] sm:$0xff]
    %v100 = vld [vmem:[%s3 + $0x1f0] sm:$0xff]
    %v101 = vld [vmem:[%s3 + $0x1f8] sm:$0xff]
    %v102 = vld [vmem:[%s3 + $0x200] sm:$0xff]
    %v103 = vld [vmem:[%s3 + $0x208] sm:$0xff]
    %v104 = vld [vmem:[%s3 + $0x210] sm:$0xff]
    %v105 = vld [vmem:[%s3 + $0x218] sm:$0xff]
    %v106 = vld [vmem:[%s3 + $0x220] sm:$0xff]
    %v107 = vld [vmem:[%s3 + $0x228] sm:$0xff]
    %v108 = vld [vmem:[%s3 + $0x230] sm:$0xff]
    %v109 = vld [vmem:[%s3 + $0x238] sm:$0xff]
    %v110 = vld [vmem:[%s3 + $0x240] sm:$0xff]
    %v111 = vld [vmem:[%s3 + $0x248] sm:$0xff]
    %v112 = vld [vmem:[%s3 + $0x250] sm:$0xff]
    %v113 = vld [vmem:[%s3 + $0x258] sm:$0xff]
    %v114 = vld [vmem:[%s3 + $0x260] sm:$0xff]
    %v115 = vld [vmem:[%s3 + $0x268] sm:$0xff]
    %v116 = vld [vmem:[%s3 + $0x270] sm:$0xff]
    %v117 = vld [vmem:[%s3 + $0x278] sm:$0xff]
    %v118 = vld [vmem:[%s3 + $0x280] sm:$0xff]
    %v119 = vld [vmem:[%s3 + $0x288] sm:$0xff]
    %v120 = vld [vmem:[%s3 + $0x290] sm:$0xff]
    %v121 = vld [vmem:[%s3 + $0x298] sm:$0xff]
    %v122 = vld [vmem:[%s3 + $0x2a0] sm:$0xff]
    %v123 = vld [vmem:[%s3 + $0x2a8] sm:$0xff]
    %v124 = vld [vmem:[%s3 + $0x2b0] sm:$0xff]
    %v125 = vld [vmem:[%s3 + $0x2b8] sm:$0xff]
    %v126 = vld [vmem:[%s3 + $0x2c0] sm:$0xff]
    %v127 = vld [vmem:[%s3 + $0x2c8] sm:$0xff]
    %v128 = vld [vmem:[%s3 + $0x2d0] sm:$0xff]
    %v129 = vld [vmem:[%s3 + $0x2d8] sm:$0xff]
    %v130 = vld [vmem:[%s3 + $0x2e0] sm:$0xff]
    %v131 = vld [vmem:[%s3 + $0x2e8] sm:$0xff]
    %v132 = vld [vmem:[%s3 + $0x2f0] sm:$0xff]
    %v133 = vld [vmem:[%s3 + $0x2f8] sm:$0xff]
    %134 = vmatprep.subr.mxu0 %v84
    %135 = vmatpush1.msra.mxu0 %v83
    %136 = vmatprep.subr.mxu0 %v81
    %137 = vmatpush1.msra.mxu0 %v80
    %138 = vmatprep.subr.mxu0 %v78
    %139 = vmatpush1.msra.mxu0 %v77
    %140 = vmatprep.subr.mxu0 %v75
    %141 = vmatpush1.msra.mxu0 %v74
    %142 = vmatprep.subr.mxu0 %v72
    %143 = vmatpush1.msra.mxu0 %v71
    %144 = vmatprep.subr.mxu0 %v69
    %145 = vmatpush1.msra.mxu0 %v68
    %146 = vmatprep.subr.mxu0 %v66
    %147 = vmatpush1.msra.mxu0 %v65
    %148 = vmatprep.subr.mxu0 %v63
    %149 = vmatpush1.msra.mxu0 %v62
    %150 = vmatprep.subr.mxu0 %v60
    %151 = vmatpush1.msra.mxu0 %v59
    %152 = vmatprep.subr.mxu0 %v57
    %153 = vmatpush1.msra.mxu0 %v56
    %154 = vmatprep.subr.mxu0 %v54
    %155 = vmatpush1.msra.mxu0 %v53
    %156 = vmatprep.subr.mxu0 %v51
    %157 = vmatpush1.msra.mxu0 %v50
    %158 = vmatprep.subr.mxu0 %v48
    %159 = vmatpush1.msra.mxu0 %v47
    %160 = vmatprep.subr.mxu0 %v45
    %161 = vmatpush1.msra.mxu0 %v44
    %162 = vmatprep.subr.mxu0 %v42
    %163 = vmatpush1.msra.mxu0 %v41
    %164 = vmatprep.subr.mxu0 %v39
    %165 = vmatpush1.msra.mxu0 %v38
    %166 = vmatprep.subr.mxu0 %v132
    %167 = vmatpush2.msra.mxu0 %v131
    %168 = vmatprep.subr.mxu0 %v129
    %169 = vmatpush2.msra.mxu0 %v128
    %170 = vmatprep.subr.mxu0 %v126
    %171 = vmatpush2.msra.mxu0 %v125
    %172 = vmatprep.subr.mxu0 %v123
    %173 = vmatpush2.msra.mxu0 %v122
    %174 = vmatprep.subr.mxu0 %v120
    %175 = vmatpush2.msra.mxu0 %v119
    %176 = vmatprep.subr.mxu0 %v117
    %177 = vmatpush2.msra.mxu0 %v116
    %178 = vmatprep.subr.mxu0 %v114
    %179 = vmatpush2.msra.mxu0 %v113
    %180 = vmatprep.subr.mxu0 %v111
    %181 = vmatpush2.msra.mxu0 %v110
    %182 = vmatprep.subr.mxu0 %v108
    %183 = vmatpush2.msra.mxu0 %v107
    %184 = vmatprep.subr.mxu0 %v105
    %185 = vmatpush2.msra.mxu0 %v104
    %186 = vmatprep.subr.mxu0 %v102
    %187 = vmatpush2.msra.mxu0 %v101
    %188 = vmatprep.subr.mxu0 %v99
    %189 = vmatpush2.msra.mxu0 %v98
    %190 = vmatprep.subr.mxu0 %v96
    %191 = vmatpush2.msra.mxu0 %v95
    %192 = vmatprep.subr.mxu0 %v93
    %193 = vmatpush2.msra.mxu0 %v92
    %194 = vmatprep.subr.mxu0 %v90
    %195 = vmatpush2.msra.mxu0 %v89
    %196 = vmatprep.subr.mxu0 %v87
    %197 = vmatpush2.msra.mxu0 %v86
    %198 = vmatprep.mubr.f32.mxu0 %v37
    %199 = vmatmul.mubr.f32.gmra.mxu0 %v36
    %v200 = vpop.f32.mrf.mxu0
    %v201 = vadd.f32 0.0, %v200
    %v202 = vpop.f32.mrf.mxu0
    %v203 = vadd.f32 0.0, %v202
    %204 = vdwg.mxu0
    %205 = vmatprep.subr.mxu0 0.0
    %206 = vmatpush1.msra.mxu0 %v85
    %207 = vmatprep.subr.mxu0 0.0
    %208 = vmatpush1.msra.mxu0 %v82
    %209 = vmatprep.subr.mxu0 0.0
    %210 = vmatpush1.msra.mxu0 %v79
    %211 = vmatprep.subr.mxu0 0.0
    %212 = vmatpush1.msra.mxu0 %v76
    %213 = vmatprep.subr.mxu0 0.0
    %214 = vmatpush1.msra.mxu0 %v73
    %215 = vmatprep.subr.mxu0 0.0
    %216 = vmatpush1.msra.mxu0 %v70
    %217 = vmatprep.subr.mxu0 0.0
    %218 = vmatpush1.msra.mxu0 %v67
    %219 = vmatprep.subr.mxu0 0.0
    %220 = vmatpush1.msra.mxu0 %v64
    %221 = vmatprep.subr.mxu0 0.0
    %222 = vmatpush1.msra.mxu0 %v61
    %223 = vmatprep.subr.mxu0 0.0
    %224 = vmatpush1.msra.mxu0 %v58
    %225 = vmatprep.subr.mxu0 0.0
    %226 = vmatpush1.msra.mxu0 %v55
    %227 = vmatprep.subr.mxu0 0.0
    %228 = vmatpush1.msra.mxu0 %v52
    %229 = vmatprep.subr.mxu0 0.0
    %230 = vmatpush1.msra.mxu0 %v49
    %231 = vmatprep.subr.mxu0 0.0
    %232 = vmatpush1.msra.mxu0 %v46
    %233 = vmatprep.subr.mxu0 0.0
    %234 = vmatpush1.msra.mxu0 %v43
    %235 = vmatprep.subr.mxu0 0.0
    %236 = vmatpush1.msra.mxu0 %v40
    %237 = vmatprep.subr.mxu0 0.0
    %238 = vmatpush2.msra.mxu0 %v133
    %239 = vmatprep.subr.mxu0 0.0
    %240 = vmatpush2.msra.mxu0 %v130
    %241 = vmatprep.subr.mxu0 0.0
    %242 = vmatpush2.msra.mxu0 %v127
    %243 = vmatprep.subr.mxu0 0.0
    %244 = vmatpush2.msra.mxu0 %v124
    %245 = vmatprep.subr.mxu0 0.0
    %246 = vmatpush2.msra.mxu0 %v121
    %247 = vmatprep.subr.mxu0 0.0
    %248 = vmatpush2.msra.mxu0 %v118
    %249 = vmatprep.subr.mxu0 0.0
    %250 = vmatpush2.msra.mxu0 %v115
    %251 = vmatprep.subr.mxu0 0.0
    %252 = vmatpush2.msra.mxu0 %v112
    %253 = vmatprep.subr.mxu0 0.0
    %254 = vmatpush2.msra.mxu0 %v109
    %255 = vmatprep.subr.mxu0 0.0
    %256 = vmatpush2.msra.mxu0 %v106
    %257 = vmatprep.subr.mxu0 0.0
    %258 = vmatpush2.msra.mxu0 %v103
    %259 = vmatprep.subr.mxu0 0.0
    %260 = vmatpush2.msra.mxu0 %v100
    %261 = vmatprep.subr.mxu0 0.0
    %262 = vmatpush2.msra.mxu0 %v97
    %263 = vmatprep.subr.mxu0 0.0
    %264 = vmatpush2.msra.mxu0 %v94
    %265 = vmatprep.subr.mxu0 0.0
    %266 = vmatpush2.msra.mxu0 %v91
    %267 = vmatprep.subr.mxu0 0.0
    %268 = vmatpush2.msra.mxu0 %v88
    %269 = vmatprep.mubr.f32.mxu0 %v37
    %270 = vmatmul.mubr.f32.gmra.mxu0 %v36
    %v271 = vpop.f32.mrf.mxu0
    %v272 = vadd.f32 0.0, %v271
    %v273 = vpop.f32.mrf.mxu0
    %274 = vdwg.mxu0
    %v275 = vtanh.pop %v201
    %v276 = vtanh.pop %v203
    %v277 = vtanh.pop %v272
    %v278 = vld [vmem:[%s2] sm:$0xff]
    %v279 = vld [vmem:[%s2 + $0x8] sm:$0xff]
    %v280 = vld [vmem:[%s2 + $0x10] sm:$0xff]
    %v281 = vld [vmem:[%s2 + $0x18] sm:$0xff]
    %v282 = vld [vmem:[%s2 + $0x20] sm:$0xff]
    %v283 = vld [vmem:[%s2 + $0x28] sm:$0xff]
    %v284 = vld [vmem:[%s2 + $0x30] sm:$0xff]
    %v285 = vld [vmem:[%s2 + $0x38] sm:$0xff]
    %v286 = vld [vmem:[%s2 + $0x40] sm:$0xff]
    %v287 = vld [vmem:[%s2 + $0x48] sm:$0xff]
    %v288 = vld [vmem:[%s2 + $0x50] sm:$0xff]
    %v289 = vld [vmem:[%s2 + $0x58] sm:$0xff]
    %v290 = vld [vmem:[%s2 + $0x60] sm:$0xff]
    %v291 = vld [vmem:[%s2 + $0x68] sm:$0xff]
    %v292 = vld [vmem:[%s2 + $0x70] sm:$0xff]
    %v293 = vld [vmem:[%s2 + $0x78] sm:$0xff]
    %v294 = vld [vmem:[%s2 + $0x80] sm:$0xff]
    %v295 = vld [vmem:[%s2 + $0x88] sm:$0xff]
    %v296 = vld [vmem:[%s2 + $0x90] sm:$0xff]
    %v297 = vld [vmem:[%s2 + $0x98] sm:$0xff]
    %v298 = vld [vmem:[%s2 + $0xa0] sm:$0xff]
    %v299 = vld [vmem:[%s2 + $0xa8] sm:$0xff]
    %v300 = vld [vmem:[%s2 + $0xb0] sm:$0xff]
    %v301 = vld [vmem:[%s2 + $0xb8] sm:$0xff]
    %v302 = vld [vmem:[%s2 + $0xc0] sm:$0xff]
    %v303 = vld [vmem:[%s2 + $0xc8] sm:$0xff]
    %v304 = vld [vmem:[%s2 + $0xd0] sm:$0xff]
    %v305 = vld [vmem:[%s2 + $0xd8] sm:$0xff]
    %v306 = vld [vmem:[%s2 + $0xe0] sm:$0xff]
    %v307 = vld [vmem:[%s2 + $0xe8] sm:$0xff]
    %v308 = vld [vmem:[%s2 + $0xf0] sm:$0xff]
    %v309 = vld [vmem:[%s2 + $0xf8] sm:$0xff]
    %v310 = vld [vmem:[%s2 + $0x100] sm:$0xff]
    %v311 = vld [vmem:[%s2 + $0x108] sm:$0xff]
    %v312 = vld [vmem:[%s2 + $0x110] sm:$0xff]
    %v313 = vld [vmem:[%s2 + $0x118] sm:$0xff]
    %v314 = vld [vmem:[%s2 + $0x120] sm:$0xff]
    %v315 = vld [vmem:[%s2 + $0x128] sm:$0xff]
    %v316 = vld [vmem:[%s2 + $0x130] sm:$0xff]
    %v317 = vld [vmem:[%s2 + $0x138] sm:$0xff]
    %v318 = vld [vmem:[%s2 + $0x140] sm:$0xff]
    %v319 = vld [vmem:[%s2 + $0x148] sm:$0xff]
    %v320 = vld [vmem:[%s2 + $0x150] sm:$0xff]
    %v321 = vld [vmem:[%s2 + $0x158] sm:$0xff]
    %v322 = vld [vmem:[%s2 + $0x160] sm:$0xff]
    %v323 = vld [vmem:[%s2 + $0x168] sm:$0xff]
    %v324 = vld [vmem:[%s2 + $0x170] sm:$0xff]
    %v325 = vld [vmem:[%s2 + $0x178] sm:$0xff]
    %v326 = vld [vmem:[%s2 + $0x180] sm:$0xff]
    %v327 = vld [vmem:[%s2 + $0x188] sm:$0xff]
    %v328 = vld [vmem:[%s2 + $0x190] sm:$0xff]
    %v329 = vld [vmem:[%s2 + $0x198] sm:$0xff]
    %v330 = vld [vmem:[%s2 + $0x1a0] sm:$0xff]
    %v331 = vld [vmem:[%s2 + $0x1a8] sm:$0xff]
    %v332 = vld [vmem:[%s2 + $0x1b0] sm:$0xff]
    %v333 = vld [vmem:[%s2 + $0x1b8] sm:$0xff]
    %v334 = vld [vmem:[%s2 + $0x1c0] sm:$0xff]
    %v335 = vld [vmem:[%s2 + $0x1c8] sm:$0xff]
    %v336 = vld [vmem:[%s2 + $0x1d0] sm:$0xff]
    %v337 = vld [vmem:[%s2 + $0x1d8] sm:$0xff]
    %v338 = vld [vmem:[%s2 + $0x1e0] sm:$0xff]
    %v339 = vld [vmem:[%s2 + $0x1e8] sm:$0xff]
    %v340 = vld [vmem:[%s2 + $0x1f0] sm:$0xff]
    %v341 = vld [vmem:[%s2 + $0x1f8] sm:$0xff]
    %v342 = vld [vmem:[%s2 + $0x200] sm:$0xff]
    %v343 = vld [vmem:[%s2 + $0x208] sm:$0xff]
    %v344 = vld [vmem:[%s2 + $0x210] sm:$0xff]
    %v345 = vld [vmem:[%s2 + $0x218] sm:$0xff]
    %v346 = vld [vmem:[%s2 + $0x220] sm:$0xff]
    %v347 = vld [vmem:[%s2 + $0x228] sm:$0xff]
    %v348 = vld [vmem:[%s2 + $0x230] sm:$0xff]
    %v349 = vld [vmem:[%s2 + $0x238] sm:$0xff]
    %v350 = vld [vmem:[%s2 + $0x240] sm:$0xff]
    %v351 = vld [vmem:[%s2 + $0x248] sm:$0xff]
    %v352 = vld [vmem:[%s2 + $0x250] sm:$0xf]
    %v353 = vld [vmem:[%s2 + $0x258] sm:$0xf]
    %vm354 = vcmask 359424
    %v356 = vsel %vm354, %v35, 0
    %vm358 = vcmask 1043456
    %v360 = vsel %vm358, %v352, 0
    %v363 = vsel %vm358, %v353, 0
    %365 = vmatprep.subr.mxu0 %v309
    %366 = vmatpush1.msra.mxu0 %v308
    %367 = vmatprep.subr.mxu0 %v307
    %368 = vmatpush1.msra.mxu0 %v306
    %369 = vmatprep.subr.mxu0 %v305
    %370 = vmatpush1.msra.mxu0 %v304
    %371 = vmatprep.subr.mxu0 %v303
    %372 = vmatpush1.msra.mxu0 %v302
    %373 = vmatprep.subr.mxu0 %v301
    %374 = vmatpush1.msra.mxu0 %v300
    %375 = vmatprep.subr.mxu0 %v299
    %376 = vmatpush1.msra.mxu0 %v298
    %377 = vmatprep.subr.mxu0 %v297
    %378 = vmatpush1.msra.mxu0 %v296
    %379 = vmatprep.subr.mxu0 %v295
    %380 = vmatpush1.msra.mxu0 %v294
    %381 = vmatprep.subr.mxu0 %v293
    %382 = vmatpush1.msra.mxu0 %v292
    %383 = vmatprep.subr.mxu0 %v291
    %384 = vmatpush1.msra.mxu0 %v290
    %385 = vmatprep.subr.mxu0 %v289
    %386 = vmatpush1.msra.mxu0 %v288
    %387 = vmatprep.subr.mxu0 %v287
    %388 = vmatpush1.msra.mxu0 %v286
    %389 = vmatprep.subr.mxu0 %v285
    %390 = vmatpush1.msra.mxu0 %v284
    %391 = vmatprep.subr.mxu0 %v283
    %392 = vmatpush1.msra.mxu0 %v282
    %393 = vmatprep.subr.mxu0 %v281
    %394 = vmatpush1.msra.mxu0 %v280
    %395 = vmatprep.subr.mxu0 %v279
    %396 = vmatpush1.msra.mxu0 %v278
    %397 = vmatprep.subr.mxu0 %v341
    %398 = vmatpush2.msra.mxu0 %v340
    %399 = vmatprep.subr.mxu0 %v339
    %400 = vmatpush2.msra.mxu0 %v338
    %401 = vmatprep.subr.mxu0 %v337
    %402 = vmatpush2.msra.mxu0 %v336
    %403 = vmatprep.subr.mxu0 %v335
    %404 = vmatpush2.msra.mxu0 %v334
    %405 = vmatprep.subr.mxu0 %v333
    %406 = vmatpush2.msra.mxu0 %v332
    %407 = vmatprep.subr.mxu0 %v331
    %408 = vmatpush2.msra.mxu0 %v330
    %409 = vmatprep.subr.mxu0 %v329
    %410 = vmatpush2.msra.mxu0 %v328
    %411 = vmatprep.subr.mxu0 %v327
    %412 = vmatpush2.msra.mxu0 %v326
    %413 = vmatprep.subr.mxu0 %v325
    %414 = vmatpush2.msra.mxu0 %v324
    %415 = vmatprep.subr.mxu0 %v323
    %416 = vmatpush2.msra.mxu0 %v322
    %417 = vmatprep.subr.mxu0 %v321
    %418 = vmatpush2.msra.mxu0 %v320
    %419 = vmatprep.subr.mxu0 %v319
    %420 = vmatpush2.msra.mxu0 %v318
    %421 = vmatprep.subr.mxu0 %v317
    %422 = vmatpush2.msra.mxu0 %v316
    %423 = vmatprep.subr.mxu0 %v315
    %424 = vmatpush2.msra.mxu0 %v314
    %425 = vmatprep.subr.mxu0 %v313
    %426 = vmatpush2.msra.mxu0 %v312
    %427 = vmatprep.subr.mxu0 %v311
    %428 = vmatpush2.msra.mxu0 %v310
    %429 = vmatprep.mubr.f32.mxu0 %v34
    %430 = vmatmul.mubr.f32.gmra.mxu0 %v33
    %v431 = vpop.f32.mrf.mxu0
    %v432 = vadd.f32 0.0, %v431
    %v433 = vpop.f32.mrf.mxu0
    %v434 = vadd.f32 0.0, %v433
    %435 = vdwg.mxu0
    %436 = vmatprep.subr.mxu0 0.0
    %437 = vmatpush1.msra.mxu0 0.0
    %438 = vmatprep.subr.mxu0 0.0
    %439 = vmatpush1.msra.mxu0 0.0
    %440 = vmatprep.subr.mxu0 0.0
    %441 = vmatpush1.msra.mxu0 0.0
    %442 = vmatprep.subr.mxu0 0.0
    %443 = vmatpush1.msra.mxu0 0.0
    %444 = vmatprep.subr.mxu0 0.0
    %445 = vmatpush1.msra.mxu0 0.0
    %446 = vmatprep.subr.mxu0 0.0
    %447 = vmatpush1.msra.mxu0 0.0
    %448 = vmatprep.subr.mxu0 0.0
    %449 = vmatpush1.msra.mxu0 0.0
    %450 = vmatprep.subr.mxu0 0.0
    %451 = vmatpush1.msra.mxu0 0.0
    %452 = vmatprep.subr.mxu0 0.0
    %453 = vmatpush1.msra.mxu0 0.0
    %454 = vmatprep.subr.mxu0 0.0
    %455 = vmatpush1.msra.mxu0 0.0
    %456 = vmatprep.subr.mxu0 %v363
    %457 = vmatpush1.msra.mxu0 %v360
    %458 = vmatprep.subr.mxu0 %v351
    %459 = vmatpush1.msra.mxu0 %v350
    %460 = vmatprep.subr.mxu0 %v349
    %461 = vmatpush1.msra.mxu0 %v348
    %462 = vmatprep.subr.mxu0 %v347
    %463 = vmatpush1.msra.mxu0 %v346
    %464 = vmatprep.subr.mxu0 %v345
    %465 = vmatpush1.msra.mxu0 %v344
    %466 = vmatprep.subr.mxu0 %v343
    %467 = vmatpush1.msra.mxu0 %v342
    %468 = vmatprep.subr.mxu0 0.0
    %469 = vmatpush2.msra.mxu0 0.0
    %470 = vmatprep.subr.mxu0 0.0
    %471 = vmatpush2.msra.mxu0 0.0
    %472 = vmatprep.subr.mxu0 0.0
    %473 = vmatpush2.msra.mxu0 0.0
    %474 = vmatprep.subr.mxu0 0.0
    %475 = vmatpush2.msra.mxu0 0.0
    %476 = vmatprep.subr.mxu0 0.0
    %477 = vmatpush2.msra.mxu0 0.0
    %478 = vmatprep.subr.mxu0 0.0
    %479 = vmatpush2.msra.mxu0 0.0
    %480 = vmatprep.subr.mxu0 0.0
    %481 = vmatpush2.msra.mxu0 0.0
    %482 = vmatprep.subr.mxu0 0.0
    %483 = vmatpush2.msra.mxu0 0.0
    %484 = vmatprep.subr.mxu0 0.0
    %485 = vmatpush2.msra.mxu0 0.0
    %486 = vmatprep.subr.mxu0 0.0
    %487 = vmatpush2.msra.mxu0 0.0
    %488 = vmatprep.subr.mxu0 0.0
    %489 = vmatpush2.msra.mxu0 0.0
    %490 = vmatprep.subr.mxu0 0.0
    %491 = vmatpush2.msra.mxu0 0.0
    %492 = vmatprep.subr.mxu0 0.0
    %493 = vmatpush2.msra.mxu0 0.0
    %494 = vmatprep.subr.mxu0 0.0
    %495 = vmatpush2.msra.mxu0 0.0
    %496 = vmatprep.subr.mxu0 0.0
    %497 = vmatpush2.msra.mxu0 0.0
    %498 = vmatprep.subr.mxu0 0.0
    %499 = vmatpush2.msra.mxu0 0.0
    %500 = vmatprep.mubr.f32.mxu0 0.0
    %501 = vmatmul.mubr.f32.gmra.mxu0 %v356
    %v502 = vpop.f32.mrf.mxu0
    %v503 = vadd.f32 %v432, %v502
    %v504 = vpop.f32.mrf.mxu0
    %v505 = vadd.f32 %v434, %v504
    %506 = vdwg.mxu0
    %v507 = vtanh.pop %v503
    %v508 = vtanh.pop %v505
    %v509 = vsel %vm354, %v277, -inf
    %v510 = vmax.f32 %v275, %v276
    %v511 = vmax.f32 %v510, %v509
    %512 = vmax.xlane.f32.xlu0 %v511
    %v513 = vpop.xlane.xlu0 %512
    %v514 = vsub.f32 %v275, %v513
    %v515 = vsub.f32 %v276, %v513
    %v516 = vsub.f32 %v277, %v513
    %v517 = vmul.f32 %v514, 1.442695
    %v518 = vpow.pop %v517
    %v519 = vmul.f32 %v515, 1.442695
    %v520 = vpow.pop %v519
    %v521 = vmul.f32 %v516, 1.442695
    %v522 = vpow.pop %v521
    %v523 = vadd.f32 %v518, %v520
    %v524 = vsel %vm354, %v522, 0.0
    %v525 = vadd.f32 %v523, %v524
    %526 = vadd.xlane.f32.xlu0 %v525
    %v527 = vpop.xlane.xlu0 %526
    %v528 = vrcp.pop %v527
    %v529 = vmul.f32 %v518, %v528
    %v530 = vmul.f32 %v520, %v528
    %v531 = vmul.f32 %v522, %v528
    %v532 = vmax.f32 %v507, %v508
    %533 = vmax.xlane.f32.xlu0 %v532
    %v534 = vpop.xlane.xlu0 %533
    %v535 = vsub.f32 %v507, %v534
    %v536 = vsub.f32 %v508, %v534
    %v537 = vmul.f32 %v535, 1.442695
    %v538 = vpow.pop %v537
    %v539 = vmul.f32 %v536, 1.442695
    %v540 = vpow.pop %v539
    %v541 = vadd.f32 %v538, %v540
    %542 = vadd.xlane.f32.xlu0 %v541
    %v543 = vpop.xlane.xlu0 %542
    %v544 = vrcp.pop %v543
    %v545 = vmul.f32 %v538, %v544
    %v546 = vmul.f32 %v540, %v544
    %v547 = vmul.f32 %v33, %v529
    %v548 = vmul.f32 %v34, %v530
    %v549 = vmul.f32 %v35, %v531
    %v550 = vmul.f32 %v36, %v545
    %v551 = vmul.f32 %v37, %v546
    %v552 = vld [vmem:[%s4] sm:$0xff]
    %v553 = vld [vmem:[%s4 + $0x8] sm:$0xff]
    %v554 = vld [vmem:[%s4 + $0x10] sm:$0xff]
    %v555 = vld [vmem:[%s4 + $0x18] sm:$0xff]
    %v556 = vld [vmem:[%s4 + $0x20] sm:$0xff]
    %v557 = vld [vmem:[%s4 + $0x28] sm:$0xff]
    %v558 = vld [vmem:[%s4 + $0x30] sm:$0xff]
    %v559 = vld [vmem:[%s4 + $0x38] sm:$0xff]
    %v560 = vld [vmem:[%s4 + $0x40] sm:$0xff]
    %v561 = vld [vmem:[%s4 + $0x48] sm:$0xff]
    %v562 = vld [vmem:[%s4 + $0x50] sm:$0xff]
    %v563 = vld [vmem:[%s4 + $0x58] sm:$0xff]
    %v564 = vld [vmem:[%s4 + $0x60] sm:$0xff]
    %v565 = vld [vmem:[%s4 + $0x68] sm:$0xff]
    %v566 = vld [vmem:[%s4 + $0x70] sm:$0xff]
    %v567 = vld [vmem:[%s4 + $0x78] sm:$0xff]
    %v568 = vld [vmem:[%s4 + $0x80] sm:$0xff]
    %v569 = vld [vmem:[%s4 + $0x88] sm:$0xff]
    %v570 = vld [vmem:[%s4 + $0x90] sm:$0xff]
    %v571 = vld [vmem:[%s4 + $0x98] sm:$0xff]
    %v572 = vld [vmem:[%s4 + $0xa0] sm:$0xff]
    %v573 = vld [vmem:[%s4 + $0xa8] sm:$0xff]
    %v574 = vld [vmem:[%s4 + $0xb0] sm:$0xff]
    %v575 = vld [vmem:[%s4 + $0xb8] sm:$0xff]
    %v576 = vld [vmem:[%s4 + $0xc0] sm:$0xff]
    %v577 = vld [vmem:[%s4 + $0xc8] sm:$0xff]
    %v578 = vld [vmem:[%s4 + $0xd0] sm:$0xff]
    %v579 = vld [vmem:[%s4 + $0xd8] sm:$0xff]
    %v580 = vld [vmem:[%s4 + $0xe0] sm:$0xff]
    %v581 = vld [vmem:[%s4 + $0xe8] sm:$0xff]
    %v582 = vld [vmem:[%s4 + $0xf0] sm:$0xff]
    %v583 = vld [vmem:[%s4 + $0xf8] sm:$0xff]
    %v584 = vld [vmem:[%s4 + $0x100] sm:$0xff]
    %v585 = vld [vmem:[%s4 + $0x108] sm:$0xff]
    %v586 = vld [vmem:[%s4 + $0x110] sm:$0xff]
    %v587 = vld [vmem:[%s4 + $0x118] sm:$0xff]
    %v588 = vld [vmem:[%s4 + $0x120] sm:$0xff]
    %v589 = vld [vmem:[%s4 + $0x128] sm:$0xf]
    %v590 = vld [vmem:[%s5] sm:$0xff]
    %v591 = vld [vmem:[%s5 + $0x8] sm:$0xff]
    %v592 = vld [vmem:[%s5 + $0x10] sm:$0xff]
    %v593 = vld [vmem:[%s5 + $0x18] sm:$0xff]
    %v594 = vld [vmem:[%s5 + $0x20] sm:$0xff]
    %v595 = vld [vmem:[%s5 + $0x28] sm:$0xff]
    %v596 = vld [vmem:[%s5 + $0x30] sm:$0xff]
    %v597 = vld [vmem:[%s5 + $0x38] sm:$0xff]
    %v598 = vld [vmem:[%s5 + $0x40] sm:$0xff]
    %v599 = vld [vmem:[%s5 + $0x48] sm:$0xff]
    %v600 = vld [vmem:[%s5 + $0x50] sm:$0xff]
    %v601 = vld [vmem:[%s5 + $0x58] sm:$0xff]
    %v602 = vld [vmem:[%s5 + $0x60] sm:$0xff]
    %v603 = vld [vmem:[%s5 + $0x68] sm:$0xff]
    %v604 = vld [vmem:[%s5 + $0x70] sm:$0xff]
    %v605 = vld [vmem:[%s5 + $0x78] sm:$0xff]
    %v606 = vld [vmem:[%s5 + $0x80] sm:$0xff]
    %v607 = vld [vmem:[%s5 + $0x88] sm:$0xff]
    %v608 = vld [vmem:[%s5 + $0x90] sm:$0xff]
    %v609 = vld [vmem:[%s5 + $0x98] sm:$0xff]
    %v610 = vld [vmem:[%s5 + $0xa0] sm:$0xff]
    %v611 = vld [vmem:[%s5 + $0xa8] sm:$0xff]
    %v612 = vld [vmem:[%s5 + $0xb0] sm:$0xff]
    %v613 = vld [vmem:[%s5 + $0xb8] sm:$0xff]
    %v614 = vld [vmem:[%s5 + $0xc0] sm:$0xff]
    %v615 = vld [vmem:[%s5 + $0xc8] sm:$0xff]
    %v616 = vld [vmem:[%s5 + $0xd0] sm:$0xff]
    %v617 = vld [vmem:[%s5 + $0xd8] sm:$0xff]
    %v618 = vld [vmem:[%s5 + $0xe0] sm:$0xff]
    %v619 = vld [vmem:[%s5 + $0xe8] sm:$0xff]
    %v620 = vld [vmem:[%s5 + $0xf0] sm:$0xff]
    %v621 = vld [vmem:[%s5 + $0xf8] sm:$0xff]
    %622 = vmatprep.subr.mxu0 0.0
    %623 = vmatpush1.msra.mxu0 %v605
    %624 = vmatprep.subr.mxu0 0.0
    %625 = vmatpush1.msra.mxu0 %v604
    %626 = vmatprep.subr.mxu0 0.0
    %627 = vmatpush1.msra.mxu0 %v603
    %628 = vmatprep.subr.mxu0 0.0
    %629 = vmatpush1.msra.mxu0 %v602
    %630 = vmatprep.subr.mxu0 0.0
    %631 = vmatpush1.msra.mxu0 %v601
    %632 = vmatprep.subr.mxu0 0.0
    %633 = vmatpush1.msra.mxu0 %v600
    %634 = vmatprep.subr.mxu0 0.0
    %635 = vmatpush1.msra.mxu0 %v599
    %636 = vmatprep.subr.mxu0 0.0
    %637 = vmatpush1.msra.mxu0 %v598
    %638 = vmatprep.subr.mxu0 0.0
    %639 = vmatpush1.msra.mxu0 %v597
    %640 = vmatprep.subr.mxu0 0.0
    %641 = vmatpush1.msra.mxu0 %v596
    %642 = vmatprep.subr.mxu0 0.0
    %643 = vmatpush1.msra.mxu0 %v595
    %644 = vmatprep.subr.mxu0 0.0
    %645 = vmatpush1.msra.mxu0 %v594
    %646 = vmatprep.subr.mxu0 0.0
    %647 = vmatpush1.msra.mxu0 %v593
    %648 = vmatprep.subr.mxu0 0.0
    %649 = vmatpush1.msra.mxu0 %v592
    %650 = vmatprep.subr.mxu0 0.0
    %651 = vmatpush1.msra.mxu0 %v591
    %652 = vmatprep.subr.mxu0 0.0
    %653 = vmatpush1.msra.mxu0 %v590
    %654 = vmatprep.subr.mxu0 0.0
    %655 = vmatpush2.msra.mxu0 %v621
    %656 = vmatprep.subr.mxu0 0.0
    %657 = vmatpush2.msra.mxu0 %v620
    %658 = vmatprep.subr.mxu0 0.0
    %659 = vmatpush2.msra.mxu0 %v619
    %660 = vmatprep.subr.mxu0 0.0
    %661 = vmatpush2.msra.mxu0 %v618
    %662 = vmatprep.subr.mxu0 0.0
    %663 = vmatpush2.msra.mxu0 %v617
    %664 = vmatprep.subr.mxu0 0.0
    %665 = vmatpush2.msra.mxu0 %v616
    %666 = vmatprep.subr.mxu0 0.0
    %667 = vmatpush2.msra.mxu0 %v615
    %668 = vmatprep.subr.mxu0 0.0
    %669 = vmatpush2.msra.mxu0 %v614
    %670 = vmatprep.subr.mxu0 0.0
    %671 = vmatpush2.msra.mxu0 %v613
    %672 = vmatprep.subr.mxu0 0.0
    %673 = vmatpush2.msra.mxu0 %v612
    %674 = vmatprep.subr.mxu0 0.0
    %675 = vmatpush2.msra.mxu0 %v611
    %676 = vmatprep.subr.mxu0 0.0
    %677 = vmatpush2.msra.mxu0 %v610
    %678 = vmatprep.subr.mxu0 0.0
    %679 = vmatpush2.msra.mxu0 %v609
    %680 = vmatprep.subr.mxu0 0.0
    %681 = vmatpush2.msra.mxu0 %v608
    %682 = vmatprep.subr.mxu0 0.0
    %683 = vmatpush2.msra.mxu0 %v607
    %684 = vmatprep.subr.mxu0 0.0
    %685 = vmatpush2.msra.mxu0 %v606
    %686 = vmatprep.mubr.f32.mxu0 %v551
    %687 = vmatmul.mubr.f32.gmra.mxu0 %v550
    %v688 = vpop.f32.mrf.mxu0
    %v689 = vadd.f32 0.0, %v688
    %v690 = vpop.f32.mrf.mxu0
    %691 = vdwg.mxu0
    %v693 = vsel %vm354, %v549, 0
    %v696 = vsel %vm358, %v589, 0
    %698 = vmatprep.subr.mxu0 0.0
    %699 = vmatpush1.msra.mxu0 %v567
    %700 = vmatprep.subr.mxu0 0.0
    %701 = vmatpush1.msra.mxu0 %v566
    %702 = vmatprep.subr.mxu0 0.0
    %703 = vmatpush1.msra.mxu0 %v565
    %704 = vmatprep.subr.mxu0 0.0
    %705 = vmatpush1.msra.mxu0 %v564
    %706 = vmatprep.subr.mxu0 0.0
    %707 = vmatpush1.msra.mxu0 %v563
    %708 = vmatprep.subr.mxu0 0.0
    %709 = vmatpush1.msra.mxu0 %v562
    %710 = vmatprep.subr.mxu0 0.0
    %711 = vmatpush1.msra.mxu0 %v561
    %712 = vmatprep.subr.mxu0 0.0
    %713 = vmatpush1.msra.mxu0 %v560
    %714 = vmatprep.subr.mxu0 0.0
    %715 = vmatpush1.msra.mxu0 %v559
    %716 = vmatprep.subr.mxu0 0.0
    %717 = vmatpush1.msra.mxu0 %v558
    %718 = vmatprep.subr.mxu0 0.0
    %719 = vmatpush1.msra.mxu0 %v557
    %720 = vmatprep.subr.mxu0 0.0
    %721 = vmatpush1.msra.mxu0 %v556
    %722 = vmatprep.subr.mxu0 0.0
    %723 = vmatpush1.msra.mxu0 %v555
    %724 = vmatprep.subr.mxu0 0.0
    %725 = vmatpush1.msra.mxu0 %v554
    %726 = vmatprep.subr.mxu0 0.0
    %727 = vmatpush1.msra.mxu0 %v553
    %728 = vmatprep.subr.mxu0 0.0
    %729 = vmatpush1.msra.mxu0 %v552
    %730 = vmatprep.subr.mxu0 0.0
    %731 = vmatpush2.msra.mxu0 %v583
    %732 = vmatprep.subr.mxu0 0.0
    %733 = vmatpush2.msra.mxu0 %v582
    %734 = vmatprep.subr.mxu0 0.0
    %735 = vmatpush2.msra.mxu0 %v581
    %736 = vmatprep.subr.mxu0 0.0
    %737 = vmatpush2.msra.mxu0 %v580
    %738 = vmatprep.subr.mxu0 0.0
    %739 = vmatpush2.msra.mxu0 %v579
    %740 = vmatprep.subr.mxu0 0.0
    %741 = vmatpush2.msra.mxu0 %v578
    %742 = vmatprep.subr.mxu0 0.0
    %743 = vmatpush2.msra.mxu0 %v577
    %744 = vmatprep.subr.mxu0 0.0
    %745 = vmatpush2.msra.mxu0 %v576
    %746 = vmatprep.subr.mxu0 0.0
    %747 = vmatpush2.msra.mxu0 %v575
    %748 = vmatprep.subr.mxu0 0.0
    %749 = vmatpush2.msra.mxu0 %v574
    %750 = vmatprep.subr.mxu0 0.0
    %751 = vmatpush2.msra.mxu0 %v573
    %752 = vmatprep.subr.mxu0 0.0
    %753 = vmatpush2.msra.mxu0 %v572
    %754 = vmatprep.subr.mxu0 0.0
    %755 = vmatpush2.msra.mxu0 %v571
    %756 = vmatprep.subr.mxu0 0.0
    %757 = vmatpush2.msra.mxu0 %v570
    %758 = vmatprep.subr.mxu0 0.0
    %759 = vmatpush2.msra.mxu0 %v569
    %760 = vmatprep.subr.mxu0 0.0
    %761 = vmatpush2.msra.mxu0 %v568
    %762 = vmatprep.mubr.f32.mxu0 %v548
    %763 = vmatmul.mubr.f32.gmra.mxu0 %v547
    %v764 = vpop.f32.mrf.mxu0
    %v765 = vadd.f32 %v689, %v764
    %v766 = vpop.f32.mrf.mxu0
    %767 = vdwg.mxu0
    %768 = vmatprep.subr.mxu0 0.0
    %769 = vmatpush1.msra.mxu0 0.0
    %770 = vmatprep.subr.mxu0 0.0
    %771 = vmatpush1.msra.mxu0 0.0
    %772 = vmatprep.subr.mxu0 0.0
    %773 = vmatpush1.msra.mxu0 0.0
    %774 = vmatprep.subr.mxu0 0.0
    %775 = vmatpush1.msra.mxu0 0.0
    %776 = vmatprep.subr.mxu0 0.0
    %777 = vmatpush1.msra.mxu0 0.0
    %778 = vmatprep.subr.mxu0 0.0
    %779 = vmatpush1.msra.mxu0 0.0
    %780 = vmatprep.subr.mxu0 0.0
    %781 = vmatpush1.msra.mxu0 0.0
    %782 = vmatprep.subr.mxu0 0.0
    %783 = vmatpush1.msra.mxu0 0.0
    %784 = vmatprep.subr.mxu0 0.0
    %785 = vmatpush1.msra.mxu0 0.0
    %786 = vmatprep.subr.mxu0 0.0
    %787 = vmatpush1.msra.mxu0 0.0
    %788 = vmatprep.subr.mxu0 0.0
    %789 = vmatpush1.msra.mxu0 %v696
    %790 = vmatprep.subr.mxu0 0.0
    %791 = vmatpush1.msra.mxu0 %v588
    %792 = vmatprep.subr.mxu0 0.0
    %793 = vmatpush1.msra.mxu0 %v587
    %794 = vmatprep.subr.mxu0 0.0
    %795 = vmatpush1.msra.mxu0 %v586
    %796 = vmatprep.subr.mxu0 0.0
    %797 = vmatpush1.msra.mxu0 %v585
    %798 = vmatprep.subr.mxu0 0.0
    %799 = vmatpush1.msra.mxu0 %v584
    %800 = vmatprep.subr.mxu0 0.0
    %801 = vmatpush2.msra.mxu0 0.0
    %802 = vmatprep.subr.mxu0 0.0
    %803 = vmatpush2.msra.mxu0 0.0
    %804 = vmatprep.subr.mxu0 0.0
    %805 = vmatpush2.msra.mxu0 0.0
    %806 = vmatprep.subr.mxu0 0.0
    %807 = vmatpush2.msra.mxu0 0.0
    %808 = vmatprep.subr.mxu0 0.0
    %809 = vmatpush2.msra.mxu0 0.0
    %810 = vmatprep.subr.mxu0 0.0
    %811 = vmatpush2.msra.mxu0 0.0
    %812 = vmatprep.subr.mxu0 0.0
    %813 = vmatpush2.msra.mxu0 0.0
    %814 = vmatprep.subr.mxu0 0.0
    %815 = vmatpush2.msra.mxu0 0.0
    %816 = vmatprep.subr.mxu0 0.0
    %817 = vmatpush2.msra.mxu0 0.0
    %818 = vmatprep.subr.mxu0 0.0
    %819 = vmatpush2.msra.mxu0 0.0
    %820 = vmatprep.subr.mxu0 0.0
    %821 = vmatpush2.msra.mxu0 0.0
    %822 = vmatprep.subr.mxu0 0.0
    %823 = vmatpush2.msra.mxu0 0.0
    %824 = vmatprep.subr.mxu0 0.0
    %825 = vmatpush2.msra.mxu0 0.0
    %826 = vmatprep.subr.mxu0 0.0
    %827 = vmatpush2.msra.mxu0 0.0
    %828 = vmatprep.subr.mxu0 0.0
    %829 = vmatpush2.msra.mxu0 0.0
    %830 = vmatprep.subr.mxu0 0.0
    %831 = vmatpush2.msra.mxu0 0.0
    %832 = vmatprep.mubr.f32.mxu0 0.0
    %833 = vmatmul.mubr.f32.gmra.mxu0 %v693
    %v834 = vpop.f32.mrf.mxu0
    %v835 = vadd.f32 %v765, %v834
    %v836 = vpop.f32.mrf.mxu0
    %837 = vdwg.mxu0
    %v838 = vld [vmem:[%s6] sm:$0x1]
    %v840 = vlaneseq
    %v841 = vshrl.u32 %v840, 7
    %v842 = vsub.s32 0, %v841
    %v843 = vrot.slane %v838, %v842
    %v845 = vadd.f32 %v835, %v843
    %v846 = vmax.f32 %v845, 0.0
    %v847 = vld [vmem:[%s7] sm:$0xff]
    %v848 = vld [vmem:[%s7 + $0x8] sm:$0xff]
    %v849 = vld [vmem:[%s7 + $0x10] sm:$0xff]
    %v850 = vld [vmem:[%s7 + $0x18] sm:$0xff]
    %v851 = vld [vmem:[%s7 + $0x20] sm:$0xff]
    %v852 = vld [vmem:[%s7 + $0x28] sm:$0xff]
    %v853 = vld [vmem:[%s7 + $0x30] sm:$0xff]
    %v854 = vld [vmem:[%s7 + $0x38] sm:$0xff]
    %v855 = vld [vmem:[%s7 + $0x40] sm:$0xff]
    %v856 = vld [vmem:[%s7 + $0x48] sm:$0xff]
    %v857 = vld [vmem:[%s7 + $0x50] sm:$0xff]
    %v858 = vld [vmem:[%s7 + $0x58] sm:$0xff]
    %v859 = vld [vmem:[%s7 + $0x60] sm:$0xff]
    %v860 = vld [vmem:[%s7 + $0x68] sm:$0xff]
    %v861 = vld [vmem:[%s7 + $0x70] sm:$0xff]
    %v862 = vld [vmem:[%s7 + $0x78] sm:$0xff]
    %v863 = vld [vmem:[%s8] sm:$0x1]
    %v865 = vlaneseq
    %v866 = vshrl.u32 %v865, 7
    %v867 = vsub.s32 0, %v866
    %v868 = vrot.slane %v863, %v867
    %870 = vmatprep.subr.mxu0 0.0
    %871 = vmatpush1.msra.mxu0 %v862
    %872 = vmatprep.subr.mxu0 0.0
    %873 = vmatpush1.msra.mxu0 %v861
    %874 = vmatprep.subr.mxu0 0.0
    %875 = vmatpush1.msra.mxu0 %v860
    %876 = vmatprep.subr.mxu0 0.0
    %877 = vmatpush1.msra.mxu0 %v859
    %878 = vmatprep.subr.mxu0 0.0
    %879 = vmatpush1.msra.mxu0 %v858
    %880 = vmatprep.subr.mxu0 0.0
    %881 = vmatpush1.msra.mxu0 %v857
    %882 = vmatprep.subr.mxu0 0.0
    %883 = vmatpush1.msra.mxu0 %v856
    %884 = vmatprep.subr.mxu0 0.0
    %885 = vmatpush1.msra.mxu0 %v855
    %886 = vmatprep.subr.mxu0 0.0
    %887 = vmatpush1.msra.mxu0 %v854
    %888 = vmatprep.subr.mxu0 0.0
    %889 = vmatpush1.msra.mxu0 %v853
    %890 = vmatprep.subr.mxu0 0.0
    %891 = vmatpush1.msra.mxu0 %v852
    %892 = vmatprep.subr.mxu0 0.0
    %893 = vmatpush1.msra.mxu0 %v851
    %894 = vmatprep.subr.mxu0 0.0
    %895 = vmatpush1.msra.mxu0 %v850
    %896 = vmatprep.subr.mxu0 0.0
    %897 = vmatpush1.msra.mxu0 %v849
    %898 = vmatprep.subr.mxu0 0.0
    %899 = vmatpush1.msra.mxu0 %v848
    %900 = vmatprep.subr.mxu0 0.0
    %901 = vmatpush1.msra.mxu0 %v847
    %902 = vmatprep.subr.mxu0 0.0
    %903 = vmatpush2.msra.mxu0 0.0
    %904 = vmatprep.subr.mxu0 0.0
    %905 = vmatpush2.msra.mxu0 0.0
    %906 = vmatprep.subr.mxu0 0.0
    %907 = vmatpush2.msra.mxu0 0.0
    %908 = vmatprep.subr.mxu0 0.0
    %909 = vmatpush2.msra.mxu0 0.0
    %910 = vmatprep.subr.mxu0 0.0
    %911 = vmatpush2.msra.mxu0 0.0
    %912 = vmatprep.subr.mxu0 0.0
    %913 = vmatpush2.msra.mxu0 0.0
    %914 = vmatprep.subr.mxu0 0.0
    %915 = vmatpush2.msra.mxu0 0.0
    %916 = vmatprep.subr.mxu0 0.0
    %917 = vmatpush2.msra.mxu0 0.0
    %918 = vmatprep.subr.mxu0 0.0
    %919 = vmatpush2.msra.mxu0 0.0
    %920 = vmatprep.subr.mxu0 0.0
    %921 = vmatpush2.msra.mxu0 0.0
    %922 = vmatprep.subr.mxu0 0.0
    %923 = vmatpush2.msra.mxu0 0.0
    %924 = vmatprep.subr.mxu0 0.0
    %925 = vmatpush2.msra.mxu0 0.0
    %926 = vmatprep.subr.mxu0 0.0
    %927 = vmatpush2.msra.mxu0 0.0
    %928 = vmatprep.subr.mxu0 0.0
    %929 = vmatpush2.msra.mxu0 0.0
    %930 = vmatprep.subr.mxu0 0.0
    %931 = vmatpush2.msra.mxu0 0.0
    %932 = vmatprep.subr.mxu0 0.0
    %933 = vmatpush2.msra.mxu0 0.0
    %934 = vmatprep.mubr.f32.mxu0 0.0
    %935 = vmatmul.mubr.f32.gmra.mxu0 %v846
    %v936 = vpop.f32.mrf.mxu0
    %v937 = vadd.f32 %v868, %v936
    %v938 = vpop.f32.mrf.mxu0
    %939 = vdwg.mxu0
    %vm940 = vcmask 523264
    %941 = vst.msk [vmem:[#allocation2] sm:$0xff] %vm940, %v937
    // Predicated region
    $region38: #{tpu_custom_call.1} parent=1 // pred_check
      _
    $region39: #{tpu_custom_call.1} parent=1 // pred_check_branch
      %943 = sbr.rel (0) target = $region41
    $region40: #{tpu_custom_call.1} parent=1 // pred_region
      %s945 = ssub.s32 128, 128
      %946 = vsyncadd [#allocation3], %s945
      %s948 = sshll.u32 [#allocation2], 4
      %s949 = int_to_ptr.vmem [resolvable:$true] %s948
      %951 = dma.vmem_to_hbm [thread:$0]  %s949, 128, %s9, [#allocation3]
    $region41: #{tpu_custom_call.1} parent=1 // pred_fallthru
      _
    // Predicated region
    $region42: #{tpu_custom_call.1} parent=1 // pred_check
      _
    $region43: #{tpu_custom_call.1} parent=1 // pred_check_branch
      %953 = sbr.rel (0) target = $region45
    $region44: #{tpu_custom_call.1} parent=1 // pred_region
      %954 = dma.done [#allocation3], 128
    $region45: #{tpu_custom_call.1} parent=1 // pred_fallthru
      _
    %955 = vsyncpa [#allocation3], 1

</llo_original>
